<compile_context>
chip_gen: v6e
topology: v6e:2x2x1
jax: 0.10.0
libtpu: 0.0.40
codegen_flags: <defaults>
</compile_context>

<pallas_src>
import functools

import jax
import jax.numpy as jnp
from jax.experimental import pallas as pl
from jax.experimental.pallas import tpu as pltpu


def _multitask_loss_kernel(losses_ref, log_vars_ref, is_reg_ref, out_ref, *,
                           reduction: str, inv_n: float):
    losses = losses_ref[...].astype(jnp.float32)       # (1, n) f32
    log_vars = log_vars_ref[...].astype(jnp.float32)   # (1, n) f32
    # For 0/1 flags, 1 / (is_regression + 1)  ==  select(flag, 0.5, 1.0)  (VPU op).
    inv_scale = jnp.where(is_reg_ref[...] != 0, 0.5, 1.0)

    # coeffs * losses + log(stds)  ==  losses * exp(-log_vars) * inv_scale + 0.5*log_vars
    mt = losses * jnp.exp(-log_vars) * inv_scale + 0.5 * log_vars   # (1, n) f32

    if reduction == 'sum':
        out_ref[0, 0] = jnp.sum(mt)                    # scalar -> SMEM
    elif reduction == 'mean':
        out_ref[0, 0] = jnp.sum(mt) * inv_n            # scalar -> SMEM
    else:  # 'none' -> per-task vector; lane-sparse store is fine at n_tasks ~ 8
        out_ref[...] = mt.astype(out_ref.dtype)


def multitask_loss(losses, log_vars, is_regression, reduction='sum'):
    """Pallas implementation of MultiTaskLoss.forward.

    Args:
      losses:        (n_tasks,) per-task losses.
      log_vars:      (n_tasks,) learnable log-variances (the nn.Parameter).
      is_regression: (n_tasks,) 0/1 flags (1 = regression task).
      reduction:     'sum', 'mean', or 'none'.

    Returns:
      scalar loss (sum/mean) or (n_tasks,) vector (none), in losses.dtype.
    """
    n_tasks = losses.shape[0]
    dtype = losses.dtype

    # Present each operand as a (1, n) row.  Reshapes are metadata-only; the
    # astype calls are no-ops for f32 inputs (all in-kernel math is f32).
    losses2 = losses.astype(jnp.float32).reshape(1, n_tasks)
    log_vars2 = log_vars.astype(jnp.float32).reshape(1, n_tasks)
    is_reg2 = is_regression.astype(jnp.float32).reshape(1, n_tasks)

    kernel = functools.partial(_multitask_loss_kernel,
                               reduction=reduction,
                               inv_n=1.0 / n_tasks)

    vec_spec = pl.BlockSpec((1, n_tasks), lambda: (0, 0))
    cost = pl.CostEstimate(flops=6 * n_tasks,
                           transcendentals=n_tasks,
                           bytes_accessed=16 * n_tasks)

    if reduction in ('sum', 'mean'):
        # Scalar result through SMEM (f32); cast to losses.dtype in the wrapper.
        out_shape = jax.ShapeDtypeStruct((1, 1), jnp.float32)
        out_spec = pl.BlockSpec(memory_space=pltpu.MemorySpace.SMEM)
    else:
        out_shape = jax.ShapeDtypeStruct((1, n_tasks), dtype)
        out_spec = vec_spec

    out = pl.pallas_call(
        kernel,
        out_shape=out_shape,
        in_specs=[vec_spec, vec_spec, vec_spec],
        out_specs=out_spec,
        cost_estimate=cost,
    )(losses2, log_vars2, is_reg2)

    if reduction in ('sum', 'mean'):
        return out[0, 0].astype(dtype)
    return out[0]


def multitask_loss_reference(losses, log_vars, is_regression, reduction='sum'):
    """Pure-JAX reference mirroring the PyTorch forward op-for-op."""
    dtype = losses.dtype
    stds = (jnp.exp(log_vars) ** 0.5).astype(dtype)
    is_reg = is_regression.astype(dtype)
    coeffs = 1.0 / ((is_reg + 1.0) * stds ** 2)
    mt = coeffs * losses + jnp.log(stds)
    if reduction == 'sum':
        return mt.sum()
    if reduction == 'mean':
        return mt.mean()
    return mt


if __name__ == "__main__":
    key = jax.random.PRNGKey(0)
    n_tasks = 8  # small, consistent with len(is_regression)

    k_loss, k_lv = jax.random.split(key)
    # Per-task losses (non-negative), deterministic from PRNGKey(0).
    losses = jax.random.uniform(k_loss, (n_tasks,), dtype=jnp.float32,
                                minval=0.1, maxval=2.0)
    # Non-zero log_vars so the exp / scaling path is actually exercised.
    log_vars = 0.5 * jax.random.normal(k_lv, (n_tasks,), dtype=jnp.float32)
    # Fixed is_regression flag buffer (1 = regression task).
    is_regression = jnp.array([1, 0, 1, 0, 1, 1, 0, 0], dtype=jnp.float32)

    for red in ('sum', 'mean', 'none'):
        out = multitask_loss(losses, log_vars, is_regression, reduction=red)
        out = jax.block_until_ready(out)
        ref = multitask_loss_reference(losses, log_vars, is_regression,
                                       reduction=red)
        # Reference uses the less-accurate exp**0.5 / log path -> slightly
        # relaxed tolerance (per review) rather than changing the kernel.
        assert jnp.allclose(out, ref, rtol=1e-4, atol=1e-5), (red, out, ref)

    print("KERNEL_OK")
</pallas_src>

<mosaic_0001>
module attributes {stable_mosaic.version = 11 : i64} {
  func.func @_multitask_loss_kernel(%arg0: memref<1x8xf32, #tpu.memory_space<vmem>>, %arg1: memref<1x8xf32, #tpu.memory_space<vmem>>, %arg2: memref<1x8xf32, #tpu.memory_space<vmem>>, %arg3: memref<1x1xf32, #tpu.memory_space<smem>>) attributes {dimension_semantics = [], scalar_prefetch = 0 : i64, scratch_operands = 0 : i64, tpu.core_type = #tpu.core_type<tc>} {
    %c0 = arith.constant 0 : index
    %c0_0 = arith.constant 0 : index
    %0 = vector.load %arg0[%c0, %c0_0] : memref<1x8xf32, #tpu.memory_space<vmem>>, vector<1x8xf32>
    %c0_1 = arith.constant 0 : index
    %c0_2 = arith.constant 0 : index
    %1 = vector.load %arg1[%c0_1, %c0_2] : memref<1x8xf32, #tpu.memory_space<vmem>>, vector<1x8xf32>
    %c0_3 = arith.constant 0 : index
    %c0_4 = arith.constant 0 : index
    %2 = vector.load %arg2[%c0_3, %c0_4] : memref<1x8xf32, #tpu.memory_space<vmem>>, vector<1x8xf32>
    %cst = arith.constant 0.000000e+00 : f32
    %3 = vector.broadcast %cst : f32 to vector<1x8xf32>
    %4 = arith.cmpf one, %2, %3 : vector<1x8xf32>
    %cst_5 = arith.constant 5.000000e-01 : f32
    %cst_6 = arith.constant 1.000000e+00 : f32
    %5 = vector.broadcast %cst_5 : f32 to vector<1x8xf32>
    %6 = vector.broadcast %cst_6 : f32 to vector<1x8xf32>
    %7 = arith.select %4, %5, %6 : vector<1x8xi1>, vector<1x8xf32>
    %cst_7 = arith.constant 0.000000e+00 : f32
    %8 = vector.broadcast %cst_7 : f32 to vector<1x8xf32>
    %9 = arith.subf %8, %1 : vector<1x8xf32>
    %10 = math.exp %9 : vector<1x8xf32>
    %11 = arith.mulf %0, %10 : vector<1x8xf32>
    %12 = arith.mulf %11, %7 : vector<1x8xf32>
    %cst_8 = arith.constant 5.000000e-01 : f32
    %13 = vector.broadcast %cst_8 : f32 to vector<1x8xf32>
    %14 = arith.mulf %13, %1 : vector<1x8xf32>
    %15 = arith.addf %12, %14 : vector<1x8xf32>
    %16 = vector.shape_cast %15 : vector<1x8xf32> to vector<1x1x8xf32>
    %cst_9 = arith.constant dense<0.000000e+00> : vector<1xf32>
    %17 = vector.multi_reduction <add>, %16, %cst_9 [1, 2] : vector<1x1x8xf32> to vector<1xf32>
    %18 = vector.shape_cast %17 : vector<1xf32> to vector<1x1x1xf32>
    %19 = vector.extract %18[0, 0, 0] : f32 from vector<1x1x1xf32>
    %c0_10 = arith.constant 0 : index
    %c0_11 = arith.constant 0 : index
    %20 = memref.load %arg3[%c0_10, %c0_11] : memref<1x1xf32, #tpu.memory_space<smem>>
    memref.store %19, %arg3[%c0_10, %c0_11] : memref<1x1xf32, #tpu.memory_space<smem>>
    return
  }
}

</mosaic_0001>

<llo_original>
// kernel: tpu_custom_call.1
$region0: #{tpu_custom_call.1}
  #allocation0 [shape = 'u32[]', space=smem, size = 0x4, offset = 0x4, fixed_abs, tag = 'smem constant byte address 0x4 - core index']
  #allocation1 [shape = 'u32[144,128]{1,0:T(1,128)}', space=vmem, size = 0x12000, scoped, tag = 'internal scratch']
  %s0 = inlined_call_operand.hbm [shape: f32[1,8], index: 0, kind: input, shape index: {}]
  %s1 = inlined_call_operand.vmem [shape: f32[1,8], index: 1, kind: input, shape index: {}]
  %s2 = inlined_call_operand.vmem [shape: f32[1,8], index: 2, kind: input, shape index: {}]
  %s3 = inlined_call_operand.hbm [shape: f32[1,1], index: 3, kind: output, shape index: {}]
  %s4 = sld [smem:[#allocation0]]
  $region26: #{tpu_custom_call.1} parent=0
    _
  %s6 = ssub.s32 1, %s4
  %s7 = scalar_select 0, %s6, %s4
  $region1: #{tpu_custom_call.1} parent=0
    #allocation2 [shape = 'u8[512]{0}', space=vmem, size = 0x400, scoped, tag = 'input window, operand 0, single buffered']
    #allocation3 [shape = 's32[1]{0}', space=sflag, size = 0x4, scoped, tag = 'scoped memory for tpu_custom_call.1']
    #allocation4 [shape = 's32[1]{0}', space=sflag, size = 0x4, scoped, tag = 'scoped memory for tpu_custom_call.1']
    #allocation5 [shape = 'u8[512]{0}', space=smem, size = 0x200, scoped, tag = 'output window, operand 0, single buffered']
    %8 = vsyncpa [#allocation3], 0
    %9 = vsyncpa [#allocation4], 0
    // Predicated region
    $region2: #{tpu_custom_call.1} parent=1 // pred_check
      _
    $region3: #{tpu_custom_call.1} parent=1 // pred_check_branch
      %11 = sbr.rel (0) target = $region5
    $region4: #{tpu_custom_call.1} parent=1 // pred_region
      %s13 = ssub.s32 16, 16
      %14 = vsyncadd [#allocation3], %s13
      %s16 = sshll.u32 [#allocation2], 4
      %s17 = int_to_ptr.vmem [resolvable:$true] %s16
      %19 = dma.hbm_to_vmem [thread:$0]  %s0, 16, %s17, [#allocation3]
    $region5: #{tpu_custom_call.1} parent=1 // pred_fallthru
      _
    // Predicated region
    $region6: #{tpu_custom_call.1} parent=1 // pred_check
      _
    $region7: #{tpu_custom_call.1} parent=1 // pred_check_branch
      %21 = sbr.rel (0) target = $region9
    $region8: #{tpu_custom_call.1} parent=1 // pred_region
      _
    $region9: #{tpu_custom_call.1} parent=1 // pred_fallthru
      _
    // Predicated region
    $region10: #{tpu_custom_call.1} parent=1 // pred_check
      _
    $region11: #{tpu_custom_call.1} parent=1 // pred_check_branch
      %23 = sbr.rel (0) target = $region13
    $region12: #{tpu_custom_call.1} parent=1 // pred_region
      _
    $region13: #{tpu_custom_call.1} parent=1 // pred_fallthru
      _
    // Predicated region
    $region14: #{tpu_custom_call.1} parent=1 // pred_check
      _
    $region15: #{tpu_custom_call.1} parent=1 // pred_check_branch
      %25 = sbr.rel (0) target = $region17
    $region16: #{tpu_custom_call.1} parent=1 // pred_region
      %26 = dma.done [#allocation3], 16
    $region17: #{tpu_custom_call.1} parent=1 // pred_fallthru
      _
    %v27 = vld [vmem:[#allocation2] sm:$0x1]
    %v28 = vld [vmem:[%s1] sm:$0x1]
    %v29 = vld [vmem:[%s2] sm:$0x1]
    %vm30 = vcmp.ne.f32.partialorder %v29, 0.0
    %v31 = vsel %vm30, 0.5, 1.0
    %v32 = vsub.f32 0.0, %v28
    %v33 = vmul.f32 %v32, 1.442695
    %v34 = vpow.pop %v33
    %v35 = vmul.f32 %v27, %v34
    %v36 = vmul.f32 %v35, %v31
    %v37 = vmul.f32 %v28, 0.5
    %v38 = vadd.f32 %v36, %v37
    %vm39 = vcmask 57344
    %v40 = vsel %vm39, %v38, 0.0
    %41 = vadd.xlane.f32.xlu0 %v40
    %v42 = vpop.xlane.xlu0 %41
    %v43 = vrot.slane %v42, 4
    %v44 = vadd.f32 %v42, %v43
    %v45 = vrot.slane %v44, 2
    %v46 = vadd.f32 %v44, %v45
    %v47 = vrot.slane %v46, 1
    %v48 = vadd.f32 %v46, %v47
    %s49 = vtos %v48
    %s50 = scalar_lea.smem [#allocation5], 0
    %51 = sst [smem:[%s50]] %s49
    // Predicated region
    $region18: #{tpu_custom_call.1} parent=1 // pred_check
      _
    $region19: #{tpu_custom_call.1} parent=1 // pred_check_branch
      %53 = sbr.rel (0) target = $region21
    $region20: #{tpu_custom_call.1} parent=1 // pred_region
      %s55 = ssub.s32 16, 16
      %56 = vsyncadd [#allocation4], %s55
      %59 = dma.smem_to_hbm [#allocation5], 16, %s3, [#allocation4]
    $region21: #{tpu_custom_call.1} parent=1 // pred_fallthru
      _
    // Predicated region
    $region22: #{tpu_custom_call.1} parent=1 // pred_check
      _
    $region23: #{tpu_custom_call.1} parent=1 // pred_check_branch
      %61 = sbr.rel (0) target = $region25
    $region24: #{tpu_custom_call.1} parent=1 // pred_region
      %62 = dma.done [#allocation4], 16
    $region25: #{tpu_custom_call.1} parent=1 // pred_fallthru
      _
    %63 = sfence
    %64 = vsyncpa [#allocation3], 1
    %65 = vsyncpa [#allocation4], 1

</llo_original>
